<compile_context>
chip_gen: v5e
topology: v5e:2x2
jax: 0.10.0
libtpu: 0.0.40
codegen_flags: <defaults>
</compile_context>

<pallas_src>
import jax
import jax.numpy as jnp
from jax.experimental import pallas as pl
from jax.experimental.pallas import tpu as pltpu

# -- constants from the PyTorch module ---------------------------------------
TVQ_CNN_SIZE = [128, 256, 128, 64]
TVQ_EMBEDDING_DIM = 32
TVQ_LATENT_SIZE = 8
BN_EPS = 1e-5


def _round_up(x, m):
    return (x + m - 1) // m * m


# -- Pallas kernel: the whole conv/bn/relu hot path ---------------------------
def _decoder_kernel(vq_ref, os_ref,
                    w1a_ref, w1b_ref, t1_ref,
                    w2_ref, t2_ref,
                    w3_ref, t3_ref,
                    w4_ref, t4_ref,
                    wp_ref, bp_ref,
                    out_ref):
    """Chain of bf16 matmuls (f32 accumulation) with folded-BN add + ReLU."""
    # Layer 1: split-K matmul over the (non-concatenated) bf16 vq / os inputs.
    y = jnp.dot(vq_ref[...], w1a_ref[...], preferred_element_type=jnp.float32)
    y = y + jnp.dot(os_ref[...], w1b_ref[...], preferred_element_type=jnp.float32)
    h = jnp.maximum(y + t1_ref[...], 0.0)

    def layer(h, w_ref, t_ref):
        y = jnp.dot(h.astype(jnp.bfloat16), w_ref[...],
                    preferred_element_type=jnp.float32)
        return jnp.maximum(y + t_ref[...], 0.0)

    h = layer(h, w2_ref, t2_ref)
    h = layer(h, w3_ref, t3_ref)
    h = layer(h, w4_ref, t4_ref)      # lane-dense: padded to 128 cols (zeros)

    # dropout: identity in eval mode (no RNG needed).
    y = jnp.dot(h.astype(jnp.bfloat16), wp_ref[...],
                preferred_element_type=jnp.float32) + bp_ref[...]
    # narrow store: only the real action columns hit HBM.
    out_ref[...] = y[:, :out_ref.shape[1]].astype(out_ref.dtype)


# -- parameter folding ---------------------------------------------------------
def _fold_conv_bn(w, b, gamma, beta, mean, var):
    """Fold Conv1d bias + eval-mode BatchNorm1d into the weights and a shift.

    y = bn(conv(x)) = (x @ W^T + b - mean) * gamma/sqrt(var+eps) + beta
                    = x @ (W^T * scale) + shift
    """
    scale = gamma / jnp.sqrt(var + BN_EPS)                       # (C_out,)
    shift = beta + (b - mean) * scale                            # (C_out,)
    w_folded = w.T.astype(jnp.float32) * scale[None, :].astype(jnp.float32)
    return w_folded, shift.reshape(1, -1).astype(jnp.float32)


# -- wrapper ------------------------------------------------------------------
def action_vq_conv_decoder(vq_latent, os_in, params, *, row_tile=1024):
    """vq_latent: (B, L, TVQ_LATENT_SIZE*TVQ_EMBEDDING_DIM), os_in: (B, L, input_dim).

    Pass bf16 activations for minimum HBM traffic; f32 inputs are cast once.
    row_tile: 1024 is a good default on v5e/v6e/v7x; 2048+ also fits v6e but
    raise vmem_limit_bytes accordingly.
    """
    # TODO(synk): training-mode BatchNorm statistic updates and dropout RNG are
    # not implemented; this is the eval-mode forward (dropout == identity).
    B, L, vq_dim = vq_latent.shape
    input_dim = os_in.shape[-1]
    N = B * L
    action_num = params["wp"].shape[0]

    # Activations: flatten (free) and DMA as bf16; NO row padding.
    vq2 = vq_latent.reshape(N, vq_dim).astype(jnp.bfloat16)
    os_pad_dim = _round_up(max(input_dim, 16), 16)       # tiny lane pad only
    os2 = os_in.reshape(N, input_dim).astype(jnp.bfloat16)
    if os_pad_dim != input_dim:
        os2 = jnp.pad(os2, ((0, 0), (0, os_pad_dim - input_dim)))

    # Row tiling: multiples of 16 (bf16 sublane packing); >=2 blocks once N is
    # moderately large so v7x's two TensorCores both get work; partial last
    # block handled by Pallas boundary masking.
    if N <= 256:
        block_rows = _round_up(max(N, 16), 16)
    else:
        block_rows = min(row_tile, _round_up(pl.cdiv(N, 2), 16))
    grid = (pl.cdiv(N, block_rows),)

    # Fold conv bias + eval BN into weights/shift; split W1 (no input concat).
    w1f, t1 = _fold_conv_bn(params["w1"], params["b1"], params["gamma1"],
                            params["beta1"], params["mean1"], params["var1"])
    w1a = w1f[:vq_dim, :].astype(jnp.bfloat16)                    # (256, 128)
    w1b = jnp.pad(w1f[vq_dim:, :],
                  ((0, os_pad_dim - input_dim), (0, 0))).astype(jnp.bfloat16)

    hidden_layers = []
    for i in (2, 3, 4):
        wf, tf = _fold_conv_bn(params[f"w{i}"], params[f"b{i}"],
                               params[f"gamma{i}"], params[f"beta{i}"],
                               params[f"mean{i}"], params[f"var{i}"])
        if i == 4:
            # lane-dense intermediate: zero-pad 64 -> 128 output channels.
            cpad = _round_up(wf.shape[1], 128) - wf.shape[1]
            if cpad:
                wf = jnp.pad(wf, ((0, 0), (0, cpad)))
                tf = jnp.pad(tf, ((0, 0), (0, cpad)))
        hidden_layers.append((wf.astype(jnp.bfloat16), tf))

    # Head: K rows padded to the padded layer-4 width (zero rows == exact),
    # N columns padded to a full 128-lane MXU pass; kernel stores the narrow
    # [:, :action_num] slice.
    k_head = hidden_layers[-1][0].shape[1]
    out_cols = _round_up(action_num, 128)
    wp = jnp.pad(params["wp"].T.astype(jnp.float32),
                 ((0, k_head - params["wp"].shape[1]),
                  (0, out_cols - action_num))).astype(jnp.bfloat16)
    bp = jnp.pad(params["bp"].astype(jnp.float32),
                 (0, out_cols - action_num)).reshape(1, -1)

    def rep(shape):  # grid-invariant (replicated) full-array block
        return pl.BlockSpec(shape, lambda i: (0,) * len(shape))

    in_specs = [pl.BlockSpec((block_rows, vq_dim), lambda i: (i, 0)),
                pl.BlockSpec((block_rows, os_pad_dim), lambda i: (i, 0)),
                rep(w1a.shape), rep(w1b.shape), rep(t1.shape)]
    operands = [vq2, os2, w1a, w1b, t1]
    for (wf, tf) in hidden_layers:
        in_specs += [rep(wf.shape), rep(tf.shape)]
        operands += [wf, tf]
    in_specs += [rep(wp.shape), rep(bp.shape)]
    operands += [wp, bp]

    out = pl.pallas_call(
        _decoder_kernel,
        out_shape=jax.ShapeDtypeStruct((N, action_num), jnp.float32),
        grid=grid,
        in_specs=in_specs,
        out_specs=pl.BlockSpec((block_rows, action_num), lambda i: (i, 0)),
        compiler_params=pltpu.CompilerParams(
            dimension_semantics=("parallel",),
            vmem_limit_bytes=32 * 1024 * 1024),
    )(*operands)

    return {"re_policy_set": out.reshape(B, L, action_num)}


# -- deterministic parameter init (synthetic, matches __init__ shapes) --------
def init_params(key, input_dim, action_num):
    c_in = TVQ_LATENT_SIZE * TVQ_EMBEDDING_DIM + input_dim
    dims = [c_in] + TVQ_CNN_SIZE
    params = {}
    keys = jax.random.split(key, 32)
    ki = 0
    for i in range(4):
        cin, cout = dims[i], dims[i + 1]
        params[f"w{i+1}"] = 0.05 * jax.random.normal(keys[ki], (cout, cin), jnp.float32); ki += 1
        params[f"b{i+1}"] = 0.01 * jax.random.normal(keys[ki], (cout,), jnp.float32); ki += 1
        params[f"gamma{i+1}"] = 1.0 + 0.1 * jax.random.normal(keys[ki], (cout,), jnp.float32); ki += 1
        params[f"beta{i+1}"] = 0.05 * jax.random.normal(keys[ki], (cout,), jnp.float32); ki += 1
        params[f"mean{i+1}"] = 0.02 * jax.random.normal(keys[ki], (cout,), jnp.float32); ki += 1
        params[f"var{i+1}"] = 1.0 + 0.1 * jnp.abs(jax.random.normal(keys[ki], (cout,), jnp.float32)); ki += 1
    params["wp"] = 0.05 * jax.random.normal(keys[ki], (action_num, TVQ_CNN_SIZE[-1]), jnp.float32); ki += 1
    params["bp"] = 0.01 * jax.random.normal(keys[ki], (action_num,), jnp.float32)
    return params


def _reference(vq_latent, os_in, params):
    """Pure-JAX f32 reference of the same (eval-mode) forward, for validation."""
    x = jnp.concatenate([vq_latent, os_in], axis=-1)
    B, L, c_in = x.shape
    h = x.reshape(B * L, c_in).astype(jnp.float32)
    for i in range(1, 5):
        wf, tf = _fold_conv_bn(params[f"w{i}"], params[f"b{i}"],
                               params[f"gamma{i}"], params[f"beta{i}"],
                               params[f"mean{i}"], params[f"var{i}"])
        h = jnp.maximum(h @ wf + tf, 0.0)
    y = h @ params["wp"].T.astype(jnp.float32) + params["bp"]
    return y.reshape(B, L, -1)


if __name__ == "__main__":
    # (B, L, input_dim, action_num).  First config = CartPole-ish small case;
    # second exercises the unpadded / partial-last-block, multi-block path.
    configs = [(2, 8, 4, 2), (3, 110, 5, 3)]

    key = jax.random.PRNGKey(0)
    for idx, (B, L, input_dim, action_num) in enumerate(configs):
        key, k_lat, k_os, k_par = jax.random.split(key, 4)
        vq_latent = jax.random.normal(
            k_lat, (B, L, TVQ_LATENT_SIZE * TVQ_EMBEDDING_DIM), jnp.float32)
        os_in = jax.random.normal(k_os, (B, L, input_dim), jnp.float32)
        params = init_params(k_par, input_dim, action_num)

        # Caller supplies bf16 activations -> kernel DMAs half the bytes.
        out = action_vq_conv_decoder(vq_latent.astype(jnp.bfloat16),
                                     os_in.astype(jnp.bfloat16), params)
        re_ps = jax.block_until_ready(out["re_policy_set"])
        assert re_ps.shape == (B, L, action_num)

        # bf16 MXU path vs f32 reference -> looser tolerance than pure f32.
        ref = _reference(vq_latent, os_in, params)
        assert jnp.allclose(re_ps, ref, atol=3e-2, rtol=3e-2), \
            f"mismatch vs reference (config {idx})"

    print("KERNEL_OK")
</pallas_src>

<mosaic_0001>
module attributes {stable_mosaic.version = 11 : i64} {
  func.func @_decoder_kernel(%arg0: i32, %arg1: memref<16x256xbf16, #tpu.memory_space<vmem>>, %arg2: memref<16x16xbf16, #tpu.memory_space<vmem>>, %arg3: memref<256x128xbf16, #tpu.memory_space<vmem>>, %arg4: memref<16x128xbf16, #tpu.memory_space<vmem>>, %arg5: memref<1x128xf32, #tpu.memory_space<vmem>>, %arg6: memref<128x256xbf16, #tpu.memory_space<vmem>>, %arg7: memref<1x256xf32, #tpu.memory_space<vmem>>, %arg8: memref<256x128xbf16, #tpu.memory_space<vmem>>, %arg9: memref<1x128xf32, #tpu.memory_space<vmem>>, %arg10: memref<128x128xbf16, #tpu.memory_space<vmem>>, %arg11: memref<1x128xf32, #tpu.memory_space<vmem>>, %arg12: memref<128x128xbf16, #tpu.memory_space<vmem>>, %arg13: memref<1x128xf32, #tpu.memory_space<vmem>>, %arg14: memref<16x2xf32, #tpu.memory_space<vmem>>) attributes {dimension_semantics = [#tpu.dimension_semantics<parallel>], iteration_bounds = array<i64: 1>, scalar_prefetch = 0 : i64, scratch_operands = 0 : i64, tpu.core_type = #tpu.core_type<tc>, window_params = [{transform_indices = @transform_0, window_bounds = array<i64: 16, 256>}, {transform_indices = @transform_1, window_bounds = array<i64: 16, 16>}, {pipeline_mode = #tpu.pipeline_mode<synchronous>, transform_indices = @transform_2, window_bounds = array<i64: 256, 128>}, {pipeline_mode = #tpu.pipeline_mode<synchronous>, transform_indices = @transform_3, window_bounds = array<i64: 16, 128>}, {pipeline_mode = #tpu.pipeline_mode<synchronous>, transform_indices = @transform_4, window_bounds = array<i64: 1, 128>}, {pipeline_mode = #tpu.pipeline_mode<synchronous>, transform_indices = @transform_5, window_bounds = array<i64: 128, 256>}, {pipeline_mode = #tpu.pipeline_mode<synchronous>, transform_indices = @transform_6, window_bounds = array<i64: 1, 256>}, {pipeline_mode = #tpu.pipeline_mode<synchronous>, transform_indices = @transform_7, window_bounds = array<i64: 256, 128>}, {pipeline_mode = #tpu.pipeline_mode<synchronous>, transform_indices = @transform_8, window_bounds = array<i64: 1, 128>}, {pipeline_mode = #tpu.pipeline_mode<synchronous>, transform_indices = @transform_9, window_bounds = array<i64: 128, 128>}, {pipeline_mode = #tpu.pipeline_mode<synchronous>, transform_indices = @transform_10, window_bounds = array<i64: 1, 128>}, {pipeline_mode = #tpu.pipeline_mode<synchronous>, transform_indices = @transform_11, window_bounds = array<i64: 128, 128>}, {pipeline_mode = #tpu.pipeline_mode<synchronous>, transform_indices = @transform_12, window_bounds = array<i64: 1, 128>}, {transform_indices = @transform_13, window_bounds = array<i64: 16, 2>}]} {
    %c0 = arith.constant 0 : index
    %c0_0 = arith.constant 0 : index
    %0 = vector.load %arg1[%c0, %c0_0] : memref<16x256xbf16, #tpu.memory_space<vmem>>, vector<16x256xbf16>
    %c0_1 = arith.constant 0 : index
    %c0_2 = arith.constant 0 : index
    %1 = vector.load %arg3[%c0_1, %c0_2] : memref<256x128xbf16, #tpu.memory_space<vmem>>, vector<256x128xbf16>
    %cst = arith.constant dense<0.000000e+00> : vector<16x128xf32>
    %2 = tpu.matmul %0, %1, %cst {dimension_numbers = #tpu.dot_dimension_numbers<[1], [0], [0], [1], [0, 0, 1, 1], [], []>} : vector<16x256xbf16>, vector<256x128xbf16>, vector<16x128xf32> -> vector<16x128xf32>
    %c0_3 = arith.constant 0 : index
    %c0_4 = arith.constant 0 : index
    %3 = vector.load %arg2[%c0_3, %c0_4] : memref<16x16xbf16, #tpu.memory_space<vmem>>, vector<16x16xbf16>
    %c0_5 = arith.constant 0 : index
    %c0_6 = arith.constant 0 : index
    %4 = vector.load %arg4[%c0_5, %c0_6] : memref<16x128xbf16, #tpu.memory_space<vmem>>, vector<16x128xbf16>
    %cst_7 = arith.constant dense<0.000000e+00> : vector<16x128xf32>
    %5 = tpu.matmul %3, %4, %cst_7 {dimension_numbers = #tpu.dot_dimension_numbers<[1], [0], [0], [1], [0, 0, 1, 1], [], []>} : vector<16x16xbf16>, vector<16x128xbf16>, vector<16x128xf32> -> vector<16x128xf32>
    %6 = arith.addf %2, %5 : vector<16x128xf32>
    %c0_8 = arith.constant 0 : index
    %c0_9 = arith.constant 0 : index
    %7 = vector.load %arg5[%c0_8, %c0_9] : memref<1x128xf32, #tpu.memory_space<vmem>>, vector<1x128xf32>
    %8 = vector.broadcast %7 : vector<1x128xf32> to vector<16x128xf32>
    %9 = arith.addf %6, %8 : vector<16x128xf32>
    %cst_10 = arith.constant 0.000000e+00 : f32
    %10 = vector.broadcast %cst_10 : f32 to vector<16x128xf32>
    %11 = arith.maximumf %9, %10 : vector<16x128xf32>
    %12 = arith.truncf %11 : vector<16x128xf32> to vector<16x128xbf16>
    %c0_11 = arith.constant 0 : index
    %c0_12 = arith.constant 0 : index
    %13 = vector.load %arg6[%c0_11, %c0_12] : memref<128x256xbf16, #tpu.memory_space<vmem>>, vector<128x256xbf16>
    %cst_13 = arith.constant dense<0.000000e+00> : vector<16x256xf32>
    %14 = tpu.matmul %12, %13, %cst_13 {dimension_numbers = #tpu.dot_dimension_numbers<[1], [0], [0], [1], [0, 0, 1, 1], [], []>} : vector<16x128xbf16>, vector<128x256xbf16>, vector<16x256xf32> -> vector<16x256xf32>
    %c0_14 = arith.constant 0 : index
    %c0_15 = arith.constant 0 : index
    %15 = vector.load %arg7[%c0_14, %c0_15] : memref<1x256xf32, #tpu.memory_space<vmem>>, vector<1x256xf32>
    %16 = vector.broadcast %15 : vector<1x256xf32> to vector<16x256xf32>
    %17 = arith.addf %14, %16 : vector<16x256xf32>
    %cst_16 = arith.constant 0.000000e+00 : f32
    %18 = vector.broadcast %cst_16 : f32 to vector<16x256xf32>
    %19 = arith.maximumf %17, %18 : vector<16x256xf32>
    %20 = arith.truncf %19 : vector<16x256xf32> to vector<16x256xbf16>
    %c0_17 = arith.constant 0 : index
    %c0_18 = arith.constant 0 : index
    %21 = vector.load %arg8[%c0_17, %c0_18] : memref<256x128xbf16, #tpu.memory_space<vmem>>, vector<256x128xbf16>
    %cst_19 = arith.constant dense<0.000000e+00> : vector<16x128xf32>
    %22 = tpu.matmul %20, %21, %cst_19 {dimension_numbers = #tpu.dot_dimension_numbers<[1], [0], [0], [1], [0, 0, 1, 1], [], []>} : vector<16x256xbf16>, vector<256x128xbf16>, vector<16x128xf32> -> vector<16x128xf32>
    %c0_20 = arith.constant 0 : index
    %c0_21 = arith.constant 0 : index
    %23 = vector.load %arg9[%c0_20, %c0_21] : memref<1x128xf32, #tpu.memory_space<vmem>>, vector<1x128xf32>
    %24 = vector.broadcast %23 : vector<1x128xf32> to vector<16x128xf32>
    %25 = arith.addf %22, %24 : vector<16x128xf32>
    %cst_22 = arith.constant 0.000000e+00 : f32
    %26 = vector.broadcast %cst_22 : f32 to vector<16x128xf32>
    %27 = arith.maximumf %25, %26 : vector<16x128xf32>
    %28 = arith.truncf %27 : vector<16x128xf32> to vector<16x128xbf16>
    %c0_23 = arith.constant 0 : index
    %c0_24 = arith.constant 0 : index
    %29 = vector.load %arg10[%c0_23, %c0_24] : memref<128x128xbf16, #tpu.memory_space<vmem>>, vector<128x128xbf16>
    %cst_25 = arith.constant dense<0.000000e+00> : vector<16x128xf32>
    %30 = tpu.matmul %28, %29, %cst_25 {dimension_numbers = #tpu.dot_dimension_numbers<[1], [0], [0], [1], [0, 0, 1, 1], [], []>} : vector<16x128xbf16>, vector<128x128xbf16>, vector<16x128xf32> -> vector<16x128xf32>
    %c0_26 = arith.constant 0 : index
    %c0_27 = arith.constant 0 : index
    %31 = vector.load %arg11[%c0_26, %c0_27] : memref<1x128xf32, #tpu.memory_space<vmem>>, vector<1x128xf32>
    %32 = vector.broadcast %31 : vector<1x128xf32> to vector<16x128xf32>
    %33 = arith.addf %30, %32 : vector<16x128xf32>
    %cst_28 = arith.constant 0.000000e+00 : f32
    %34 = vector.broadcast %cst_28 : f32 to vector<16x128xf32>
    %35 = arith.maximumf %33, %34 : vector<16x128xf32>
    %36 = arith.truncf %35 : vector<16x128xf32> to vector<16x128xbf16>
    %c0_29 = arith.constant 0 : index
    %c0_30 = arith.constant 0 : index
    %37 = vector.load %arg12[%c0_29, %c0_30] : memref<128x128xbf16, #tpu.memory_space<vmem>>, vector<128x128xbf16>
    %cst_31 = arith.constant dense<0.000000e+00> : vector<16x128xf32>
    %38 = tpu.matmul %36, %37, %cst_31 {dimension_numbers = #tpu.dot_dimension_numbers<[1], [0], [0], [1], [0, 0, 1, 1], [], []>} : vector<16x128xbf16>, vector<128x128xbf16>, vector<16x128xf32> -> vector<16x128xf32>
    %c0_32 = arith.constant 0 : index
    %c0_33 = arith.constant 0 : index
    %39 = vector.load %arg13[%c0_32, %c0_33] : memref<1x128xf32, #tpu.memory_space<vmem>>, vector<1x128xf32>
    %40 = vector.broadcast %39 : vector<1x128xf32> to vector<16x128xf32>
    %41 = arith.addf %38, %40 : vector<16x128xf32>
    %42 = vector.extract_strided_slice %41 {offsets = [0, 0], sizes = [16, 2], strides = [1, 1]} : vector<16x128xf32> to vector<16x2xf32>
    %c0_34 = arith.constant 0 : index
    %c0_35 = arith.constant 0 : index
    %43 = vector.load %arg14[%c0_34, %c0_35] : memref<16x2xf32, #tpu.memory_space<vmem>>, vector<16x2xf32>
    tpu.vector_store %arg14[%c0_34, %c0_35], %42 {strides = array<i32>} : memref<16x2xf32, #tpu.memory_space<vmem>>, vector<16x2xf32>,
    return
  }
  func.func @transform_0(%arg0: i32) -> (i32, i32) {
    %c0_i32 = arith.constant 0 : i32
    %c0_i32_0 = arith.constant 0 : i32
    return %arg0, %c0_i32 : i32, i32
  }
  func.func @transform_1(%arg0: i32) -> (i32, i32) {
    %c0_i32 = arith.constant 0 : i32
    %c0_i32_0 = arith.constant 0 : i32
    return %arg0, %c0_i32 : i32, i32
  }
  func.func @transform_2(%arg0: i32) -> (i32, i32) {
    %c0_i32 = arith.constant 0 : i32
    %c0_i32_0 = arith.constant 0 : i32
    %c0_i32_1 = arith.constant 0 : i32
    return %c0_i32, %c0_i32_0 : i32, i32
  }
  func.func @transform_3(%arg0: i32) -> (i32, i32) {
    %c0_i32 = arith.constant 0 : i32
    %c0_i32_0 = arith.constant 0 : i32
    %c0_i32_1 = arith.constant 0 : i32
    return %c0_i32, %c0_i32_0 : i32, i32
  }
  func.func @transform_4(%arg0: i32) -> (i32, i32) {
    %c0_i32 = arith.constant 0 : i32
    %c0_i32_0 = arith.constant 0 : i32
    %c0_i32_1 = arith.constant 0 : i32
    return %c0_i32, %c0_i32_0 : i32, i32
  }
  func.func @transform_5(%arg0: i32) -> (i32, i32) {
    %c0_i32 = arith.constant 0 : i32
    %c0_i32_0 = arith.constant 0 : i32
    %c0_i32_1 = arith.constant 0 : i32
    return %c0_i32, %c0_i32_0 : i32, i32
  }
  func.func @transform_6(%arg0: i32) -> (i32, i32) {
    %c0_i32 = arith.constant 0 : i32
    %c0_i32_0 = arith.constant 0 : i32
    %c0_i32_1 = arith.constant 0 : i32
    return %c0_i32, %c0_i32_0 : i32, i32
  }
  func.func @transform_7(%arg0: i32) -> (i32, i32) {
    %c0_i32 = arith.constant 0 : i32
    %c0_i32_0 = arith.constant 0 : i32
    %c0_i32_1 = arith.constant 0 : i32
    return %c0_i32, %c0_i32_0 : i32, i32
  }
  func.func @transform_8(%arg0: i32) -> (i32, i32) {
    %c0_i32 = arith.constant 0 : i32
    %c0_i32_0 = arith.constant 0 : i32
    %c0_i32_1 = arith.constant 0 : i32
    return %c0_i32, %c0_i32_0 : i32, i32
  }
  func.func @transform_9(%arg0: i32) -> (i32, i32) {
    %c0_i32 = arith.constant 0 : i32
    %c0_i32_0 = arith.constant 0 : i32
    %c0_i32_1 = arith.constant 0 : i32
    return %c0_i32, %c0_i32_0 : i32, i32
  }
  func.func @transform_10(%arg0: i32) -> (i32, i32) {
    %c0_i32 = arith.constant 0 : i32
    %c0_i32_0 = arith.constant 0 : i32
    %c0_i32_1 = arith.constant 0 : i32
    return %c0_i32, %c0_i32_0 : i32, i32
  }
  func.func @transform_11(%arg0: i32) -> (i32, i32) {
    %c0_i32 = arith.constant 0 : i32
    %c0_i32_0 = arith.constant 0 : i32
    %c0_i32_1 = arith.constant 0 : i32
    return %c0_i32, %c0_i32_0 : i32, i32
  }
  func.func @transform_12(%arg0: i32) -> (i32, i32) {
    %c0_i32 = arith.constant 0 : i32
    %c0_i32_0 = arith.constant 0 : i32
    %c0_i32_1 = arith.constant 0 : i32
    return %c0_i32, %c0_i32_0 : i32, i32
  }
  func.func @transform_13(%arg0: i32) -> (i32, i32) {
    %c0_i32 = arith.constant 0 : i32
    %c0_i32_0 = arith.constant 0 : i32
    return %arg0, %c0_i32 : i32, i32
  }
}

</mosaic_0001>

<llo_original>
// kernel: tpu_custom_call.1
$region0: #{tpu_custom_call.1}
  #allocation0 [shape = 'u32[]', space=smem, size = 0x4, offset = 0x4, fixed_abs, tag = 'smem constant byte address 0x4 - core index']
  #allocation1 [shape = 'u32[72,128]{1,0:T(1,128)}', space=vmem, size = 0x9000, scoped, tag = 'internal scratch']
  %s0 = inlined_call_operand.hbm [shape: bf16[16,256], index: 0, kind: input, shape index: {}]
  %s1 = inlined_call_operand.hbm [shape: bf16[16,16], index: 1, kind: input, shape index: {}]
  %s2 = inlined_call_operand.hbm [shape: bf16[256,128], index: 2, kind: input, shape index: {}]
  %s3 = inlined_call_operand.hbm [shape: bf16[16,128], index: 3, kind: input, shape index: {}]
  %s4 = inlined_call_operand.vmem [shape: f32[1,128], index: 4, kind: input, shape index: {}]
  %s5 = inlined_call_operand.hbm [shape: bf16[128,256], index: 5, kind: input, shape index: {}]
  %s6 = inlined_call_operand.vmem [shape: f32[1,256], index: 6, kind: input, shape index: {}]
  %s7 = inlined_call_operand.hbm [shape: bf16[256,128], index: 7, kind: input, shape index: {}]
  %s8 = inlined_call_operand.vmem [shape: f32[1,128], index: 8, kind: input, shape index: {}]
  %s9 = inlined_call_operand.hbm [shape: bf16[128,128], index: 9, kind: input, shape index: {}]
  %s10 = inlined_call_operand.vmem [shape: f32[1,128], index: 10, kind: input, shape index: {}]
  %s11 = inlined_call_operand.hbm [shape: bf16[128,128], index: 11, kind: input, shape index: {}]
  %s12 = inlined_call_operand.vmem [shape: f32[1,128], index: 12, kind: input, shape index: {}]
  %s13 = inlined_call_operand.vmem [shape: f32[16,2], index: 13, kind: output, shape index: {}]
  %s14 = sld [smem:[#allocation0]]
  $region94: #{tpu_custom_call.1} parent=0
    _
  %s16 = ssub.s32 1, %s14
  %s17 = scalar_select 0, %s16, %s14
  $region1: #{tpu_custom_call.1} parent=0
    #allocation2 [shape = 'u8[8192]{0}', space=vmem, size = 0x2000, scoped, tag = 'input window, operand 0, single buffered']
    #allocation3 [shape = 's32[1]{0}', space=sflag, size = 0x4, scoped, tag = 'scoped memory for tpu_custom_call.1']
    #allocation4 [shape = 'u8[4096]{0}', space=vmem, size = 0x1000, scoped, tag = 'input window, operand 1, single buffered']
    #allocation5 [shape = 's32[1]{0}', space=sflag, size = 0x4, scoped, tag = 'scoped memory for tpu_custom_call.1']
    #allocation6 [shape = 'u8[65536]{0}', space=vmem, size = 0x10000, scoped, tag = 'input window, operand 2, single buffered']
    #allocation7 [shape = 'u8[4096]{0}', space=vmem, size = 0x1000, scoped, tag = 'input window, operand 3, single buffered']
    #allocation8 [shape = 's32[1]{0}', space=sflag, size = 0x4, scoped, tag = 'scoped memory for tpu_custom_call.1']
    #allocation9 [shape = 'u8[65536]{0}', space=vmem, size = 0x10000, scoped, tag = 'input window, operand 5, single buffered']
    #allocation10 [shape = 'u8[65536]{0}', space=vmem, size = 0x10000, scoped, tag = 'input window, operand 7, single buffered']
    #allocation11 [shape = 's32[1]{0}', space=sflag, size = 0x4, scoped, tag = 'scoped memory for tpu_custom_call.1']
    #allocation12 [shape = 'u8[32768]{0}', space=vmem, size = 0x8000, scoped, tag = 'input window, operand 9, single buffered']
    #allocation13 [shape = 'u8[32768]{0}', space=vmem, size = 0x8000, scoped, tag = 'input window, operand 11, single buffered']
    #allocation14 [shape = 's32[1]{0}', space=sflag, size = 0x4, scoped, tag = 'scoped memory for tpu_custom_call.1']
    %18 = vsyncpa [#allocation3], 0
    %19 = vsyncpa [#allocation5], 0
    %20 = vsyncpa [#allocation8], 0
    %21 = vsyncpa [#allocation11], 0
    %22 = vsyncpa [#allocation14], 0
    // Predicated region
    $region2: #{tpu_custom_call.1} parent=1 // pred_check
      _
    $region3: #{tpu_custom_call.1} parent=1 // pred_check_branch
      %24 = sbr.rel (0) target = $region5
    $region4: #{tpu_custom_call.1} parent=1 // pred_region
      %26 = vsyncadd [#allocation3], 0
      %s27 = sshll.u32 %s0, 4
      %s28 = int_to_ptr.hbm [resolvable:$true] %s27
      %s29 = sshll.u32 [#allocation2], 4
      %s30 = int_to_ptr.vmem [resolvable:$true] %s29
      %35 = dma.hbm_to_vmem [thread:$0]  %s28, 256, %s30, [#allocation3], 128, 128, 8
    $region5: #{tpu_custom_call.1} parent=1 // pred_fallthru
      _
    // Predicated region
    $region6: #{tpu_custom_call.1} parent=1 // pred_check
      _
    $region7: #{tpu_custom_call.1} parent=1 // pred_check_branch
      %37 = sbr.rel (0) target = $region9
    $region8: #{tpu_custom_call.1} parent=1 // pred_region
      %39 = vsyncadd [#allocation5], 0
      %s40 = sshll.u32 %s1, 4
      %s41 = int_to_ptr.hbm [resolvable:$true] %s40
      %s42 = sshll.u32 [#allocation4], 4
      %s43 = int_to_ptr.vmem [resolvable:$true] %s42
      %48 = dma.hbm_to_vmem [thread:$0]  %s41, 128, %s43, [#allocation5], 64, 64, 4
    $region9: #{tpu_custom_call.1} parent=1 // pred_fallthru
      _
    // Predicated region
    $region10: #{tpu_custom_call.1} parent=1 // pred_check
      _
    $region11: #{tpu_custom_call.1} parent=1 // pred_check_branch
      %50 = sbr.rel (0) target = $region13
    $region12: #{tpu_custom_call.1} parent=1 // pred_region
      %52 = vsyncadd [#allocation5], 0
      %s53 = sshll.u32 %s2, 4
      %s54 = int_to_ptr.hbm [resolvable:$true] %s53
      %s55 = sshll.u32 [#allocation6], 4
      %s56 = int_to_ptr.vmem [resolvable:$true] %s55
      %61 = dma.hbm_to_vmem [thread:$0]  %s54, 2048, %s56, [#allocation5], 64, 64, 4
    $region13: #{tpu_custom_call.1} parent=1 // pred_fallthru
      _
    // Predicated region
    $region14: #{tpu_custom_call.1} parent=1 // pred_check
      _
    $region15: #{tpu_custom_call.1} parent=1 // pred_check_branch
      %63 = sbr.rel (0) target = $region17
    $region16: #{tpu_custom_call.1} parent=1 // pred_region
      %65 = vsyncadd [#allocation8], 0
      %s66 = sshll.u32 %s3, 4
      %s67 = int_to_ptr.hbm [resolvable:$true] %s66
      %s68 = sshll.u32 [#allocation7], 4
      %s69 = int_to_ptr.vmem [resolvable:$true] %s68
      %74 = dma.hbm_to_vmem [thread:$0]  %s67, 128, %s69, [#allocation8], 64, 64, 4
    $region17: #{tpu_custom_call.1} parent=1 // pred_fallthru
      _
    // Predicated region
    $region18: #{tpu_custom_call.1} parent=1 // pred_check
      _
    $region19: #{tpu_custom_call.1} parent=1 // pred_check_branch
      %76 = sbr.rel (0) target = $region21
    $region20: #{tpu_custom_call.1} parent=1 // pred_region
      _
    $region21: #{tpu_custom_call.1} parent=1 // pred_fallthru
      _
    // Predicated region
    $region22: #{tpu_custom_call.1} parent=1 // pred_check
      _
    $region23: #{tpu_custom_call.1} parent=1 // pred_check_branch
      %78 = sbr.rel (0) target = $region25
    $region24: #{tpu_custom_call.1} parent=1 // pred_region
      %80 = vsyncadd [#allocation8], 0
      %s81 = sshll.u32 %s5, 4
      %s82 = int_to_ptr.hbm [resolvable:$true] %s81
      %s83 = sshll.u32 [#allocation9], 4
      %s84 = int_to_ptr.vmem [resolvable:$true] %s83
      %89 = dma.hbm_to_vmem [thread:$0]  %s82, 2048, %s84, [#allocation8], 128, 128, 8
    $region25: #{tpu_custom_call.1} parent=1 // pred_fallthru
      _
    // Predicated region
    $region26: #{tpu_custom_call.1} parent=1 // pred_check
      _
    $region27: #{tpu_custom_call.1} parent=1 // pred_check_branch
      %91 = sbr.rel (0) target = $region29
    $region28: #{tpu_custom_call.1} parent=1 // pred_region
      _
    $region29: #{tpu_custom_call.1} parent=1 // pred_fallthru
      _
    // Predicated region
    $region30: #{tpu_custom_call.1} parent=1 // pred_check
      _
    $region31: #{tpu_custom_call.1} parent=1 // pred_check_branch
      %93 = sbr.rel (0) target = $region33
    $region32: #{tpu_custom_call.1} parent=1 // pred_region
      %95 = vsyncadd [#allocation11], 0
      %s96 = sshll.u32 %s7, 4
      %s97 = int_to_ptr.hbm [resolvable:$true] %s96
      %s98 = sshll.u32 [#allocation10], 4
      %s99 = int_to_ptr.vmem [resolvable:$true] %s98
      %104 = dma.hbm_to_vmem [thread:$0]  %s97, 2048, %s99, [#allocation11], 64, 64, 4
    $region33: #{tpu_custom_call.1} parent=1 // pred_fallthru
      _
    // Predicated region
    $region34: #{tpu_custom_call.1} parent=1 // pred_check
      _
    $region35: #{tpu_custom_call.1} parent=1 // pred_check_branch
      %106 = sbr.rel (0) target = $region37
    $region36: #{tpu_custom_call.1} parent=1 // pred_region
      _
    $region37: #{tpu_custom_call.1} parent=1 // pred_fallthru
      _
    // Predicated region
    $region38: #{tpu_custom_call.1} parent=1 // pred_check
      _
    $region39: #{tpu_custom_call.1} parent=1 // pred_check_branch
      %108 = sbr.rel (0) target = $region41
    $region40: #{tpu_custom_call.1} parent=1 // pred_region
      %110 = vsyncadd [#allocation11], 0
      %s111 = sshll.u32 %s9, 4
      %s112 = int_to_ptr.hbm [resolvable:$true] %s111
      %s113 = sshll.u32 [#allocation12], 4
      %s114 = int_to_ptr.vmem [resolvable:$true] %s113
      %119 = dma.hbm_to_vmem [thread:$0]  %s112, 1024, %s114, [#allocation11], 64, 64, 4
    $region41: #{tpu_custom_call.1} parent=1 // pred_fallthru
      _
    // Predicated region
    $region42: #{tpu_custom_call.1} parent=1 // pred_check
      _
    $region43: #{tpu_custom_call.1} parent=1 // pred_check_branch
      %121 = sbr.rel (0) target = $region45
    $region44: #{tpu_custom_call.1} parent=1 // pred_region
      _
    $region45: #{tpu_custom_call.1} parent=1 // pred_fallthru
      _
    // Predicated region
    $region46: #{tpu_custom_call.1} parent=1 // pred_check
      _
    $region47: #{tpu_custom_call.1} parent=1 // pred_check_branch
      %123 = sbr.rel (0) target = $region49
    $region48: #{tpu_custom_call.1} parent=1 // pred_region
      %125 = vsyncadd [#allocation14], 0
      %s126 = sshll.u32 %s11, 4
      %s127 = int_to_ptr.hbm [resolvable:$true] %s126
      %s128 = sshll.u32 [#allocation13], 4
      %s129 = int_to_ptr.vmem [resolvable:$true] %s128
      %134 = dma.hbm_to_vmem [thread:$0]  %s127, 1024, %s129, [#allocation14], 64, 64, 4
    $region49: #{tpu_custom_call.1} parent=1 // pred_fallthru
      _
    // Predicated region
    $region50: #{tpu_custom_call.1} parent=1 // pred_check
      _
    $region51: #{tpu_custom_call.1} parent=1 // pred_check_branch
      %136 = sbr.rel (0) target = $region53
    $region52: #{tpu_custom_call.1} parent=1 // pred_region
      _
    $region53: #{tpu_custom_call.1} parent=1 // pred_fallthru
      _
    // Predicated region
    $region54: #{tpu_custom_call.1} parent=1 // pred_check
      _
    $region55: #{tpu_custom_call.1} parent=1 // pred_check_branch
      %138 = sbr.rel (0) target = $region57
    $region56: #{tpu_custom_call.1} parent=1 // pred_region
      %140 = dma.done [#allocation3], 256
    $region57: #{tpu_custom_call.1} parent=1 // pred_fallthru
      _
    // Predicated region
    $region58: #{tpu_custom_call.1} parent=1 // pred_check
      _
    $region59: #{tpu_custom_call.1} parent=1 // pred_check_branch
      %142 = sbr.rel (0) target = $region61
    $region60: #{tpu_custom_call.1} parent=1 // pred_region
      %144 = dma.done [#allocation5], 128
    $region61: #{tpu_custom_call.1} parent=1 // pred_fallthru
      _
    // Predicated region
    $region62: #{tpu_custom_call.1} parent=1 // pred_check
      _
    $region63: #{tpu_custom_call.1} parent=1 // pred_check_branch
      %146 = sbr.rel (0) target = $region65
    $region64: #{tpu_custom_call.1} parent=1 // pred_region
      %148 = dma.done [#allocation5], 2048
    $region65: #{tpu_custom_call.1} parent=1 // pred_fallthru
      _
    // Predicated region
    $region66: #{tpu_custom_call.1} parent=1 // pred_check
      _
    $region67: #{tpu_custom_call.1} parent=1 // pred_check_branch
      %150 = sbr.rel (0) target = $region69
    $region68: #{tpu_custom_call.1} parent=1 // pred_region
      %152 = dma.done [#allocation8], 128
    $region69: #{tpu_custom_call.1} parent=1 // pred_fallthru
      _
    // Predicated region
    $region70: #{tpu_custom_call.1} parent=1 // pred_check
      _
    $region71: #{tpu_custom_call.1} parent=1 // pred_check_branch
      %154 = sbr.rel (0) target = $region73
    $region72: #{tpu_custom_call.1} parent=1 // pred_region
      %156 = dma.done [#allocation8], 2048
    $region73: #{tpu_custom_call.1} parent=1 // pred_fallthru
      _
    // Predicated region
    $region74: #{tpu_custom_call.1} parent=1 // pred_check
      _
    $region75: #{tpu_custom_call.1} parent=1 // pred_check_branch
      %158 = sbr.rel (0) target = $region77
    $region76: #{tpu_custom_call.1} parent=1 // pred_region
      %160 = dma.done [#allocation11], 2048
    $region77: #{tpu_custom_call.1} parent=1 // pred_fallthru
      _
    // Predicated region
    $region78: #{tpu_custom_call.1} parent=1 // pred_check
      _
    $region79: #{tpu_custom_call.1} parent=1 // pred_check_branch
      %162 = sbr.rel (0) target = $region81
    $region80: #{tpu_custom_call.1} parent=1 // pred_region
      %164 = dma.done [#allocation11], 1024
    $region81: #{tpu_custom_call.1} parent=1 // pred_fallthru
      _
    // Predicated region
    $region82: #{tpu_custom_call.1} parent=1 // pred_check
      _
    $region83: #{tpu_custom_call.1} parent=1 // pred_check_branch
      %166 = sbr.rel (0) target = $region85
    $region84: #{tpu_custom_call.1} parent=1 // pred_region
      %168 = dma.done [#allocation14], 1024
    $region85: #{tpu_custom_call.1} parent=1 // pred_fallthru
      _
    %v170 = vld [vmem:[#allocation2] sm:$0xff]
    %v171 = vld [vmem:[#allocation2 + $0x8] sm:$0xff]
    %v172 = vld [vmem:[#allocation6] sm:$0xf]
    %v173 = vld [vmem:[#allocation6 + $0x4] sm:$0xf]
    %v174 = vld [vmem:[#allocation6 + $0x8] sm:$0xf]
    %v175 = vld [vmem:[#allocation6 + $0xc] sm:$0xf]
    %v176 = vld [vmem:[#allocation6 + $0x10] sm:$0xf]
    %v177 = vld [vmem:[#allocation6 + $0x14] sm:$0xf]
    %v178 = vld [vmem:[#allocation6 + $0x18] sm:$0xf]
    %v179 = vld [vmem:[#allocation6 + $0x1c] sm:$0xf]
    %v180 = vld [vmem:[#allocation6 + $0x20] sm:$0xf]
    %v181 = vld [vmem:[#allocation6 + $0x24] sm:$0xf]
    %v182 = vld [vmem:[#allocation6 + $0x28] sm:$0xf]
    %v183 = vld [vmem:[#allocation6 + $0x2c] sm:$0xf]
    %v184 = vld [vmem:[#allocation6 + $0x30] sm:$0xf]
    %v185 = vld [vmem:[#allocation6 + $0x34] sm:$0xf]
    %v186 = vld [vmem:[#allocation6 + $0x38] sm:$0xf]
    %v187 = vld [vmem:[#allocation6 + $0x3c] sm:$0xf]
    %v188 = vld [vmem:[#allocation6 + $0x40] sm:$0xf]
    %v189 = vld [vmem:[#allocation6 + $0x44] sm:$0xf]
    %v190 = vld [vmem:[#allocation6 + $0x48] sm:$0xf]
    %v191 = vld [vmem:[#allocation6 + $0x4c] sm:$0xf]
    %v192 = vld [vmem:[#allocation6 + $0x50] sm:$0xf]
    %v193 = vld [vmem:[#allocation6 + $0x54] sm:$0xf]
    %v194 = vld [vmem:[#allocation6 + $0x58] sm:$0xf]
    %v195 = vld [vmem:[#allocation6 + $0x5c] sm:$0xf]
    %v196 = vld [vmem:[#allocation6 + $0x60] sm:$0xf]
    %v197 = vld [vmem:[#allocation6 + $0x64] sm:$0xf]
    %v198 = vld [vmem:[#allocation6 + $0x68] sm:$0xf]
    %v199 = vld [vmem:[#allocation6 + $0x6c] sm:$0xf]
    %v200 = vld [vmem:[#allocation6 + $0x70] sm:$0xf]
    %v201 = vld [vmem:[#allocation6 + $0x74] sm:$0xf]
    %v202 = vld [vmem:[#allocation6 + $0x78] sm:$0xf]
    %v203 = vld [vmem:[#allocation6 + $0x7c] sm:$0xf]
    %v204 = vld [vmem:[#allocation4] sm:$0xf]
    %v205 = vld [vmem:[#allocation4 + $0x4] sm:$0xf]
    %v206 = vld [vmem:[#allocation7] sm:$0xf]
    %v207 = vld [vmem:[#allocation7 + $0x4] sm:$0xf]
    %v210 = vunpack.c.l.b16 %v204
    %v211 = vunpack.c.l.b16 %v205
    %v212 = vpack.c.b16 %v211, %v210
    %v215 = vunpack.c.l.b16 %v206
    %v216 = vunpack.c.l.b16 %v207
    %v217 = vpack.c.b16 %v216, %v215
    %vm219 = vcmask 130048
    %v221 = vsel %vm219, %v212, 0
    %223 = vmatpush.bf16.msra.mxu0 0
    %224 = vmatpush.bf16.msra.mxu0 0
    %225 = vmatpush.bf16.msra.mxu0 0
    %226 = vmatpush.bf16.msra.mxu0 0
    %227 = vmatpush.bf16.msra.mxu0 0
    %228 = vmatpush.bf16.msra.mxu0 0
    %229 = vmatpush.bf16.msra.mxu0 0
    %230 = vmatpush.bf16.msra.mxu0 %v217
    %231 = vmatmul.bf16.gmra.mxu0 %v221
    %v232 = vpop.f32.mrf.mxu0
    %v233 = vadd.f32 0.0, %v232
    %v234 = vpop.f32.mrf.mxu0
    %v235 = vadd.f32 0.0, %v234
    %236 = vdwg.mxu0
    %v239 = vunpack.c.l.b16 %v170
    %v240 = vunpack.c.h.b16 %v170
    %v241 = vunpack.c.l.b16 %v171
    %v242 = vunpack.c.h.b16 %v171
    %v243 = vpack.c.b16 %v241, %v239
    %v244 = vpack.c.b16 %v242, %v240
    %v279 = vunpack.c.l.b16 %v172
    %v280 = vunpack.c.l.b16 %v173
    %v281 = vunpack.c.l.b16 %v174
    %v282 = vunpack.c.l.b16 %v175
    %v283 = vunpack.c.l.b16 %v176
    %v284 = vunpack.c.l.b16 %v177
    %v285 = vunpack.c.l.b16 %v178
    %v286 = vunpack.c.l.b16 %v179
    %v287 = vunpack.c.l.b16 %v180
    %v288 = vunpack.c.l.b16 %v181
    %v289 = vunpack.c.l.b16 %v182
    %v290 = vunpack.c.l.b16 %v183
    %v291 = vunpack.c.l.b16 %v184
    %v292 = vunpack.c.l.b16 %v185
    %v293 = vunpack.c.l.b16 %v186
    %v294 = vunpack.c.l.b16 %v187
    %v295 = vunpack.c.l.b16 %v188
    %v296 = vunpack.c.l.b16 %v189
    %v297 = vunpack.c.l.b16 %v190
    %v298 = vunpack.c.l.b16 %v191
    %v299 = vunpack.c.l.b16 %v192
    %v300 = vunpack.c.l.b16 %v193
    %v301 = vunpack.c.l.b16 %v194
    %v302 = vunpack.c.l.b16 %v195
    %v303 = vunpack.c.l.b16 %v196
    %v304 = vunpack.c.l.b16 %v197
    %v305 = vunpack.c.l.b16 %v198
    %v306 = vunpack.c.l.b16 %v199
    %v307 = vunpack.c.l.b16 %v200
    %v308 = vunpack.c.l.b16 %v201
    %v309 = vunpack.c.l.b16 %v202
    %v310 = vunpack.c.l.b16 %v203
    %v311 = vpack.c.b16 %v280, %v279
    %v312 = vpack.c.b16 %v282, %v281
    %v313 = vpack.c.b16 %v284, %v283
    %v314 = vpack.c.b16 %v286, %v285
    %v315 = vpack.c.b16 %v288, %v287
    %v316 = vpack.c.b16 %v290, %v289
    %v317 = vpack.c.b16 %v292, %v291
    %v318 = vpack.c.b16 %v294, %v293
    %v319 = vpack.c.b16 %v296, %v295
    %v320 = vpack.c.b16 %v298, %v297
    %v321 = vpack.c.b16 %v300, %v299
    %v322 = vpack.c.b16 %v302, %v301
    %v323 = vpack.c.b16 %v304, %v303
    %v324 = vpack.c.b16 %v306, %v305
    %v325 = vpack.c.b16 %v308, %v307
    %v326 = vpack.c.b16 %v310, %v309
    %343 = vmatpush.bf16.msra.mxu0 %v318
    %344 = vmatpush.bf16.msra.mxu0 %v317
    %345 = vmatpush.bf16.msra.mxu0 %v316
    %346 = vmatpush.bf16.msra.mxu0 %v315
    %347 = vmatpush.bf16.msra.mxu0 %v314
    %348 = vmatpush.bf16.msra.mxu0 %v313
    %349 = vmatpush.bf16.msra.mxu0 %v312
    %350 = vmatpush.bf16.msra.mxu0 %v311
    %351 = vmatmul.bf16.gmra.mxu0 %v243
    %v352 = vpop.f32.mrf.mxu0
    %v353 = vadd.f32 %v233, %v352
    %v354 = vpop.f32.mrf.mxu0
    %v355 = vadd.f32 %v235, %v354
    %356 = vdwg.mxu0
    %357 = vmatpush.bf16.msra.mxu0 %v326
    %358 = vmatpush.bf16.msra.mxu0 %v325
    %359 = vmatpush.bf16.msra.mxu0 %v324
    %360 = vmatpush.bf16.msra.mxu0 %v323
    %361 = vmatpush.bf16.msra.mxu0 %v322
    %362 = vmatpush.bf16.msra.mxu0 %v321
    %363 = vmatpush.bf16.msra.mxu0 %v320
    %364 = vmatpush.bf16.msra.mxu0 %v319
    %365 = vmatmul.bf16.gmra.mxu0 %v244
    %v366 = vpop.f32.mrf.mxu0
    %v367 = vadd.f32 %v353, %v366
    %v368 = vpop.f32.mrf.mxu0
    %v369 = vadd.f32 %v355, %v368
    %370 = vdwg.mxu0
    %v371 = vld [vmem:[%s4] sm:$0x1]
    %v373 = vperm.slane %v371, 0
    %v375 = vadd.f32 %v367, %v373
    %v376 = vadd.f32 %v369, %v373
    %v377 = vmax.f32 %v375, 0.0
    %v378 = vmax.f32 %v376, 0.0
    %v379 = vpack.c.bf16 %v378, %v377
    %v380 = vld [vmem:[#allocation9] sm:$0xff]
    %v381 = vld [vmem:[#allocation9 + $0x8] sm:$0xff]
    %v382 = vld [vmem:[#allocation9 + $0x10] sm:$0xff]
    %v383 = vld [vmem:[#allocation9 + $0x18] sm:$0xff]
    %v384 = vld [vmem:[#allocation9 + $0x20] sm:$0xff]
    %v385 = vld [vmem:[#allocation9 + $0x28] sm:$0xff]
    %v386 = vld [vmem:[#allocation9 + $0x30] sm:$0xff]
    %v387 = vld [vmem:[#allocation9 + $0x38] sm:$0xff]
    %v388 = vld [vmem:[#allocation9 + $0x40] sm:$0xff]
    %v389 = vld [vmem:[#allocation9 + $0x48] sm:$0xff]
    %v390 = vld [vmem:[#allocation9 + $0x50] sm:$0xff]
    %v391 = vld [vmem:[#allocation9 + $0x58] sm:$0xff]
    %v392 = vld [vmem:[#allocation9 + $0x60] sm:$0xff]
    %v393 = vld [vmem:[#allocation9 + $0x68] sm:$0xff]
    %v394 = vld [vmem:[#allocation9 + $0x70] sm:$0xff]
    %v395 = vld [vmem:[#allocation9 + $0x78] sm:$0xff]
    %v396 = vld [vmem:[%s6] sm:$0x3]
    %v398 = vperm.slane %v396, 0
    %v399 = vperm.slane %v396, 1
    %v418 = vunpack.c.l.b16 %v380
    %v419 = vunpack.c.h.b16 %v380
    %v420 = vunpack.c.l.b16 %v381
    %v421 = vunpack.c.h.b16 %v381
    %v422 = vunpack.c.l.b16 %v382
    %v423 = vunpack.c.h.b16 %v382
    %v424 = vunpack.c.l.b16 %v383
    %v425 = vunpack.c.h.b16 %v383
    %v426 = vunpack.c.l.b16 %v384
    %v427 = vunpack.c.h.b16 %v384
    %v428 = vunpack.c.l.b16 %v385
    %v429 = vunpack.c.h.b16 %v385
    %v430 = vunpack.c.l.b16 %v386
    %v431 = vunpack.c.h.b16 %v386
    %v432 = vunpack.c.l.b16 %v387
    %v433 = vunpack.c.h.b16 %v387
    %v434 = vunpack.c.l.b16 %v388
    %v435 = vunpack.c.h.b16 %v388
    %v436 = vunpack.c.l.b16 %v389
    %v437 = vunpack.c.h.b16 %v389
    %v438 = vunpack.c.l.b16 %v390
    %v439 = vunpack.c.h.b16 %v390
    %v440 = vunpack.c.l.b16 %v391
    %v441 = vunpack.c.h.b16 %v391
    %v442 = vunpack.c.l.b16 %v392
    %v443 = vunpack.c.h.b16 %v392
    %v444 = vunpack.c.l.b16 %v393
    %v445 = vunpack.c.h.b16 %v393
    %v446 = vunpack.c.l.b16 %v394
    %v447 = vunpack.c.h.b16 %v394
    %v448 = vunpack.c.l.b16 %v395
    %v449 = vunpack.c.h.b16 %v395
    %v450 = vpack.c.b16 %v420, %v418
    %v451 = vpack.c.b16 %v421, %v419
    %v452 = vpack.c.b16 %v424, %v422
    %v453 = vpack.c.b16 %v425, %v423
    %v454 = vpack.c.b16 %v428, %v426
    %v455 = vpack.c.b16 %v429, %v427
    %v456 = vpack.c.b16 %v432, %v430
    %v457 = vpack.c.b16 %v433, %v431
    %v458 = vpack.c.b16 %v436, %v434
    %v459 = vpack.c.b16 %v437, %v435
    %v460 = vpack.c.b16 %v440, %v438
    %v461 = vpack.c.b16 %v441, %v439
    %v462 = vpack.c.b16 %v444, %v442
    %v463 = vpack.c.b16 %v445, %v443
    %v464 = vpack.c.b16 %v448, %v446
    %v465 = vpack.c.b16 %v449, %v447
    %482 = vmatpush.bf16.msra.mxu0 %v464
    %483 = vmatpush.bf16.msra.mxu0 %v462
    %484 = vmatpush.bf16.msra.mxu0 %v460
    %485 = vmatpush.bf16.msra.mxu0 %v458
    %486 = vmatpush.bf16.msra.mxu0 %v456
    %487 = vmatpush.bf16.msra.mxu0 %v454
    %488 = vmatpush.bf16.msra.mxu0 %v452
    %489 = vmatpush.bf16.msra.mxu0 %v450
    %490 = vmatmul.bf16.gmra.mxu0 %v379
    %v491 = vpop.f32.mrf.mxu0
    %v492 = vadd.f32 %v398, %v491
    %v493 = vpop.f32.mrf.mxu0
    %v494 = vadd.f32 %v398, %v493
    %495 = vdwg.mxu0
    %496 = vmatpush.bf16.msra.mxu0 %v465
    %497 = vmatpush.bf16.msra.mxu0 %v463
    %498 = vmatpush.bf16.msra.mxu0 %v461
    %499 = vmatpush.bf16.msra.mxu0 %v459
    %500 = vmatpush.bf16.msra.mxu0 %v457
    %501 = vmatpush.bf16.msra.mxu0 %v455
    %502 = vmatpush.bf16.msra.mxu0 %v453
    %503 = vmatpush.bf16.msra.mxu0 %v451
    %504 = vmatmul.bf16.gmra.mxu0 %v379
    %v505 = vpop.f32.mrf.mxu0
    %v506 = vadd.f32 %v399, %v505
    %v507 = vpop.f32.mrf.mxu0
    %v508 = vadd.f32 %v399, %v507
    %509 = vdwg.mxu0
    %v510 = vmax.f32 %v492, 0.0
    %v511 = vmax.f32 %v506, 0.0
    %v512 = vmax.f32 %v494, 0.0
    %v513 = vmax.f32 %v508, 0.0
    %v514 = vpack.c.bf16 %v512, %v510
    %v515 = vpack.c.bf16 %v513, %v511
    %v516 = vld [vmem:[#allocation10] sm:$0xf]
    %v517 = vld [vmem:[#allocation10 + $0x4] sm:$0xf]
    %v518 = vld [vmem:[#allocation10 + $0x8] sm:$0xf]
    %v519 = vld [vmem:[#allocation10 + $0xc] sm:$0xf]
    %v520 = vld [vmem:[#allocation10 + $0x10] sm:$0xf]
    %v521 = vld [vmem:[#allocation10 + $0x14] sm:$0xf]
    %v522 = vld [vmem:[#allocation10 + $0x18] sm:$0xf]
    %v523 = vld [vmem:[#allocation10 + $0x1c] sm:$0xf]
    %v524 = vld [vmem:[#allocation10 + $0x20] sm:$0xf]
    %v525 = vld [vmem:[#allocation10 + $0x24] sm:$0xf]
    %v526 = vld [vmem:[#allocation10 + $0x28] sm:$0xf]
    %v527 = vld [vmem:[#allocation10 + $0x2c] sm:$0xf]
    %v528 = vld [vmem:[#allocation10 + $0x30] sm:$0xf]
    %v529 = vld [vmem:[#allocation10 + $0x34] sm:$0xf]
    %v530 = vld [vmem:[#allocation10 + $0x38] sm:$0xf]
    %v531 = vld [vmem:[#allocation10 + $0x3c] sm:$0xf]
    %v532 = vld [vmem:[#allocation10 + $0x40] sm:$0xf]
    %v533 = vld [vmem:[#allocation10 + $0x44] sm:$0xf]
    %v534 = vld [vmem:[#allocation10 + $0x48] sm:$0xf]
    %v535 = vld [vmem:[#allocation10 + $0x4c] sm:$0xf]
    %v536 = vld [vmem:[#allocation10 + $0x50] sm:$0xf]
    %v537 = vld [vmem:[#allocation10 + $0x54] sm:$0xf]
    %v538 = vld [vmem:[#allocation10 + $0x58] sm:$0xf]
    %v539 = vld [vmem:[#allocation10 + $0x5c] sm:$0xf]
    %v540 = vld [vmem:[#allocation10 + $0x60] sm:$0xf]
    %v541 = vld [vmem:[#allocation10 + $0x64] sm:$0xf]
    %v542 = vld [vmem:[#allocation10 + $0x68] sm:$0xf]
    %v543 = vld [vmem:[#allocation10 + $0x6c] sm:$0xf]
    %v544 = vld [vmem:[#allocation10 + $0x70] sm:$0xf]
    %v545 = vld [vmem:[#allocation10 + $0x74] sm:$0xf]
    %v546 = vld [vmem:[#allocation10 + $0x78] sm:$0xf]
    %v547 = vld [vmem:[#allocation10 + $0x7c] sm:$0xf]
    %v548 = vld [vmem:[%s8] sm:$0x1]
    %v550 = vperm.slane %v548, 0
    %v584 = vunpack.c.l.b16 %v516
    %v585 = vunpack.c.l.b16 %v517
    %v586 = vunpack.c.l.b16 %v518
    %v587 = vunpack.c.l.b16 %v519
    %v588 = vunpack.c.l.b16 %v520
    %v589 = vunpack.c.l.b16 %v521
    %v590 = vunpack.c.l.b16 %v522
    %v591 = vunpack.c.l.b16 %v523
    %v592 = vunpack.c.l.b16 %v524
    %v593 = vunpack.c.l.b16 %v525
    %v594 = vunpack.c.l.b16 %v526
    %v595 = vunpack.c.l.b16 %v527
    %v596 = vunpack.c.l.b16 %v528
    %v597 = vunpack.c.l.b16 %v529
    %v598 = vunpack.c.l.b16 %v530
    %v599 = vunpack.c.l.b16 %v531
    %v600 = vunpack.c.l.b16 %v532
    %v601 = vunpack.c.l.b16 %v533
    %v602 = vunpack.c.l.b16 %v534
    %v603 = vunpack.c.l.b16 %v535
    %v604 = vunpack.c.l.b16 %v536
    %v605 = vunpack.c.l.b16 %v537
    %v606 = vunpack.c.l.b16 %v538
    %v607 = vunpack.c.l.b16 %v539
    %v608 = vunpack.c.l.b16 %v540
    %v609 = vunpack.c.l.b16 %v541
    %v610 = vunpack.c.l.b16 %v542
    %v611 = vunpack.c.l.b16 %v543
    %v612 = vunpack.c.l.b16 %v544
    %v613 = vunpack.c.l.b16 %v545
    %v614 = vunpack.c.l.b16 %v546
    %v615 = vunpack.c.l.b16 %v547
    %v616 = vpack.c.b16 %v585, %v584
    %v617 = vpack.c.b16 %v587, %v586
    %v618 = vpack.c.b16 %v589, %v588
    %v619 = vpack.c.b16 %v591, %v590
    %v620 = vpack.c.b16 %v593, %v592
    %v621 = vpack.c.b16 %v595, %v594
    %v622 = vpack.c.b16 %v597, %v596
    %v623 = vpack.c.b16 %v599, %v598
    %v624 = vpack.c.b16 %v601, %v600
    %v625 = vpack.c.b16 %v603, %v602
    %v626 = vpack.c.b16 %v605, %v604
    %v627 = vpack.c.b16 %v607, %v606
    %v628 = vpack.c.b16 %v609, %v608
    %v629 = vpack.c.b16 %v611, %v610
    %v630 = vpack.c.b16 %v613, %v612
    %v631 = vpack.c.b16 %v615, %v614
    %648 = vmatpush.bf16.msra.mxu0 %v623
    %649 = vmatpush.bf16.msra.mxu0 %v622
    %650 = vmatpush.bf16.msra.mxu0 %v621
    %651 = vmatpush.bf16.msra.mxu0 %v620
    %652 = vmatpush.bf16.msra.mxu0 %v619
    %653 = vmatpush.bf16.msra.mxu0 %v618
    %654 = vmatpush.bf16.msra.mxu0 %v617
    %655 = vmatpush.bf16.msra.mxu0 %v616
    %656 = vmatmul.bf16.gmra.mxu0 %v514
    %v657 = vpop.f32.mrf.mxu0
    %v658 = vadd.f32 %v550, %v657
    %v659 = vpop.f32.mrf.mxu0
    %v660 = vadd.f32 %v550, %v659
    %661 = vdwg.mxu0
    %662 = vmatpush.bf16.msra.mxu0 %v631
    %663 = vmatpush.bf16.msra.mxu0 %v630
    %664 = vmatpush.bf16.msra.mxu0 %v629
    %665 = vmatpush.bf16.msra.mxu0 %v628
    %666 = vmatpush.bf16.msra.mxu0 %v627
    %667 = vmatpush.bf16.msra.mxu0 %v626
    %668 = vmatpush.bf16.msra.mxu0 %v625
    %669 = vmatpush.bf16.msra.mxu0 %v624
    %670 = vmatmul.bf16.gmra.mxu0 %v515
    %v671 = vpop.f32.mrf.mxu0
    %v672 = vadd.f32 %v658, %v671
    %v673 = vpop.f32.mrf.mxu0
    %v674 = vadd.f32 %v660, %v673
    %675 = vdwg.mxu0
    %v676 = vmax.f32 %v672, 0.0
    %v677 = vmax.f32 %v674, 0.0
    %v678 = vpack.c.bf16 %v677, %v676
    %v679 = vld [vmem:[#allocation12] sm:$0xf]
    %v680 = vld [vmem:[#allocation12 + $0x4] sm:$0xf]
    %v681 = vld [vmem:[#allocation12 + $0x8] sm:$0xf]
    %v682 = vld [vmem:[#allocation12 + $0xc] sm:$0xf]
    %v683 = vld [vmem:[#allocation12 + $0x10] sm:$0xf]
    %v684 = vld [vmem:[#allocation12 + $0x14] sm:$0xf]
    %v685 = vld [vmem:[#allocation12 + $0x18] sm:$0xf]
    %v686 = vld [vmem:[#allocation12 + $0x1c] sm:$0xf]
    %v687 = vld [vmem:[#allocation12 + $0x20] sm:$0xf]
    %v688 = vld [vmem:[#allocation12 + $0x24] sm:$0xf]
    %v689 = vld [vmem:[#allocation12 + $0x28] sm:$0xf]
    %v690 = vld [vmem:[#allocation12 + $0x2c] sm:$0xf]
    %v691 = vld [vmem:[#allocation12 + $0x30] sm:$0xf]
    %v692 = vld [vmem:[#allocation12 + $0x34] sm:$0xf]
    %v693 = vld [vmem:[#allocation12 + $0x38] sm:$0xf]
    %v694 = vld [vmem:[#allocation12 + $0x3c] sm:$0xf]
    %v695 = vld [vmem:[%s10] sm:$0x1]
    %v697 = vperm.slane %v695, 0
    %v715 = vunpack.c.l.b16 %v679
    %v716 = vunpack.c.l.b16 %v680
    %v717 = vunpack.c.l.b16 %v681
    %v718 = vunpack.c.l.b16 %v682
    %v719 = vunpack.c.l.b16 %v683
    %v720 = vunpack.c.l.b16 %v684
    %v721 = vunpack.c.l.b16 %v685
    %v722 = vunpack.c.l.b16 %v686
    %v723 = vunpack.c.l.b16 %v687
    %v724 = vunpack.c.l.b16 %v688
    %v725 = vunpack.c.l.b16 %v689
    %v726 = vunpack.c.l.b16 %v690
    %v727 = vunpack.c.l.b16 %v691
    %v728 = vunpack.c.l.b16 %v692
    %v729 = vunpack.c.l.b16 %v693
    %v730 = vunpack.c.l.b16 %v694
    %v731 = vpack.c.b16 %v716, %v715
    %v732 = vpack.c.b16 %v718, %v717
    %v733 = vpack.c.b16 %v720, %v719
    %v734 = vpack.c.b16 %v722, %v721
    %v735 = vpack.c.b16 %v724, %v723
    %v736 = vpack.c.b16 %v726, %v725
    %v737 = vpack.c.b16 %v728, %v727
    %v738 = vpack.c.b16 %v730, %v729
    %747 = vmatpush.bf16.msra.mxu0 %v738
    %748 = vmatpush.bf16.msra.mxu0 %v737
    %749 = vmatpush.bf16.msra.mxu0 %v736
    %750 = vmatpush.bf16.msra.mxu0 %v735
    %751 = vmatpush.bf16.msra.mxu0 %v734
    %752 = vmatpush.bf16.msra.mxu0 %v733
    %753 = vmatpush.bf16.msra.mxu0 %v732
    %754 = vmatpush.bf16.msra.mxu0 %v731
    %755 = vmatmul.bf16.gmra.mxu0 %v678
    %v756 = vpop.f32.mrf.mxu0
    %v757 = vadd.f32 %v697, %v756
    %v758 = vpop.f32.mrf.mxu0
    %v759 = vadd.f32 %v697, %v758
    %760 = vdwg.mxu0
    %v761 = vmax.f32 %v757, 0.0
    %v762 = vmax.f32 %v759, 0.0
    %v763 = vpack.c.bf16 %v762, %v761
    %v764 = vld [vmem:[#allocation13] sm:$0xf]
    %v765 = vld [vmem:[#allocation13 + $0x4] sm:$0xf]
    %v766 = vld [vmem:[#allocation13 + $0x8] sm:$0xf]
    %v767 = vld [vmem:[#allocation13 + $0xc] sm:$0xf]
    %v768 = vld [vmem:[#allocation13 + $0x10] sm:$0xf]
    %v769 = vld [vmem:[#allocation13 + $0x14] sm:$0xf]
    %v770 = vld [vmem:[#allocation13 + $0x18] sm:$0xf]
    %v771 = vld [vmem:[#allocation13 + $0x1c] sm:$0xf]
    %v772 = vld [vmem:[#allocation13 + $0x20] sm:$0xf]
    %v773 = vld [vmem:[#allocation13 + $0x24] sm:$0xf]
    %v774 = vld [vmem:[#allocation13 + $0x28] sm:$0xf]
    %v775 = vld [vmem:[#allocation13 + $0x2c] sm:$0xf]
    %v776 = vld [vmem:[#allocation13 + $0x30] sm:$0xf]
    %v777 = vld [vmem:[#allocation13 + $0x34] sm:$0xf]
    %v778 = vld [vmem:[#allocation13 + $0x38] sm:$0xf]
    %v779 = vld [vmem:[#allocation13 + $0x3c] sm:$0xf]
    %v780 = vld [vmem:[%s12] sm:$0x1]
    %v782 = vperm.slane %v780, 0
    %v800 = vunpack.c.l.b16 %v764
    %v801 = vunpack.c.l.b16 %v765
    %v802 = vunpack.c.l.b16 %v766
    %v803 = vunpack.c.l.b16 %v767
    %v804 = vunpack.c.l.b16 %v768
    %v805 = vunpack.c.l.b16 %v769
    %v806 = vunpack.c.l.b16 %v770
    %v807 = vunpack.c.l.b16 %v771
    %v808 = vunpack.c.l.b16 %v772
    %v809 = vunpack.c.l.b16 %v773
    %v810 = vunpack.c.l.b16 %v774
    %v811 = vunpack.c.l.b16 %v775
    %v812 = vunpack.c.l.b16 %v776
    %v813 = vunpack.c.l.b16 %v777
    %v814 = vunpack.c.l.b16 %v778
    %v815 = vunpack.c.l.b16 %v779
    %v816 = vpack.c.b16 %v801, %v800
    %v817 = vpack.c.b16 %v803, %v802
    %v818 = vpack.c.b16 %v805, %v804
    %v819 = vpack.c.b16 %v807, %v806
    %v820 = vpack.c.b16 %v809, %v808
    %v821 = vpack.c.b16 %v811, %v810
    %v822 = vpack.c.b16 %v813, %v812
    %v823 = vpack.c.b16 %v815, %v814
    %832 = vmatpush.bf16.msra.mxu0 %v823
    %833 = vmatpush.bf16.msra.mxu0 %v822
    %834 = vmatpush.bf16.msra.mxu0 %v821
    %835 = vmatpush.bf16.msra.mxu0 %v820
    %836 = vmatpush.bf16.msra.mxu0 %v819
    %837 = vmatpush.bf16.msra.mxu0 %v818
    %838 = vmatpush.bf16.msra.mxu0 %v817
    %839 = vmatpush.bf16.msra.mxu0 %v816
    %840 = vmatmul.bf16.gmra.mxu0 %v763
    %v841 = vpop.f32.mrf.mxu0
    %v842 = vadd.f32 %v782, %v841
    %v843 = vpop.f32.mrf.mxu0
    %v844 = vadd.f32 %v782, %v843
    %845 = vdwg.mxu0
    %vm846 = vcmask 15360
    %847 = vst.msk [vmem:[%s13] sm:$0xff] %vm846, %v842
    %848 = vst.msk [vmem:[%s13 + $0x8] sm:$0xff] %vm846, %v844
    // Predicated region
    $region86: #{tpu_custom_call.1} parent=1 // pred_check
      _
    $region87: #{tpu_custom_call.1} parent=1 // pred_check_branch
      %850 = sbr.rel (0) target = $region89
    $region88: #{tpu_custom_call.1} parent=1 // pred_region
      _
    $region89: #{tpu_custom_call.1} parent=1 // pred_fallthru
      _
    // Predicated region
    $region90: #{tpu_custom_call.1} parent=1 // pred_check
      _
    $region91: #{tpu_custom_call.1} parent=1 // pred_check_branch
      %852 = sbr.rel (0) target = $region93
    $region92: #{tpu_custom_call.1} parent=1 // pred_region
      _
    $region93: #{tpu_custom_call.1} parent=1 // pred_fallthru
      _
    %853 = vsyncpa [#allocation3], 1
    %854 = vsyncpa [#allocation5], 1
    %855 = vsyncpa [#allocation8], 1
    %856 = vsyncpa [#allocation11], 1
    %857 = vsyncpa [#allocation14], 1

</llo_original>
